<compile_context>
chip_gen: v6e
topology: v6e:2x2x1
jax: 0.10.0
libtpu: 0.0.40
codegen_flags: <defaults>
</compile_context>

<pallas_src>
import functools

import jax
import jax.numpy as jnp
from jax.experimental import pallas as pl
from jax.experimental.pallas import tpu as pltpu


_TARGET_BLOCK_ELEMS = 512 * 1024      # ~2 MiB of f32 per streaming block
_SMALL_MAX_ELEMS = 512 * 1024         # single-block fast-path threshold
_LANE_CANDIDATES = (1024, 512, 256, 128)
_MIN_LANES = 128


def _round_up(v, m):
    return -(-v // m) * m


def _sublane_pack(dtype):
    # Minimum sublane multiple for the native dtype: 8 (4B), 16 (2B), 32 (1B).
    return max(8, 32 // max(1, jnp.dtype(dtype).itemsize))


def _is_v7x():
    try:
        kind = jax.devices()[0].device_kind.lower()
    except Exception:
        return False
    return "7" in kind


# --------------------------- small single-block path ------------------------

def _l2_small_kernel(x_ref, o_ref):
    xt = x_ref[...].astype(jnp.float32)
    o_ref[0, 0] = jnp.sum(xt * xt)


def _l2_sum_small(x2d):
    rows, lanes = x2d.shape
    out = pl.pallas_call(
        _l2_small_kernel,
        out_shape=jax.ShapeDtypeStruct((1, 1), jnp.float32),
        grid=(1,),
        in_specs=[pl.BlockSpec((rows, lanes), lambda i: (0, 0))],
        out_specs=pl.BlockSpec((1, 1), lambda i: (0, 0),
                               memory_space=pltpu.SMEM),
    )(x2d)
    return out[0, 0]


# ------------------------------ streaming path -------------------------------

def _l2_stream_kernel(x_ref, o_ref, acc_ref, *, rows, tile_rows, lanes,
                      inner_tiles, n_full_tiles, needs_mask):
    c = pl.program_id(0)          # TensorCore split (only >1 on v7x)
    i = pl.program_id(1)          # row-tile sweep ("arbitrary", accumulates)

    @pl.when(i == 0)
    def _():
        acc_ref[...] = jnp.zeros_like(acc_ref)

    xt = x_ref[...].astype(jnp.float32)   # keep the cast in-kernel
    sq = xt * xt

    def _fold(v):
        # (tile_rows, lanes) -> (8, lanes): vreg-aligned reshape + cross-vreg
        # VPU adds (no per-step XLU reduce, tiny accumulator traffic).
        return v.reshape(tile_rows // 8, 8, lanes).sum(axis=0)

    if needs_mask:
        logical_tile = c * inner_tiles + i

        @pl.when(logical_tile < n_full_tiles)
        def _():  # interior tiles: fast unmasked accumulate
            acc_ref[...] += _fold(sq)

        @pl.when(logical_tile >= n_full_tiles)
        def _():  # edge / duplicated (clamped) tiles: mask invalid rows to 0
            row0 = logical_tile * tile_rows
            row_ids = row0 + jax.lax.broadcasted_iota(
                jnp.int32, (tile_rows, lanes), 0)
            acc_ref[...] += _fold(jnp.where(row_ids < rows, sq, 0.0))
    else:
        acc_ref[...] += _fold(sq)

    @pl.when(i == pl.num_programs(1) - 1)
    def _():
        o_ref[0, 0] = jnp.sum(acc_ref[...])


def _l2_sum_stream(x2d):
    rows, lanes = x2d.shape
    pack = _sublane_pack(x2d.dtype)
    is_v7 = _is_v7x()

    # v7x: larger blocks (higher per-TC HBM BW makes per-step overhead pricier,
    # and the small accumulator leaves plenty of VMEM headroom).
    target_elems = _TARGET_BLOCK_ELEMS * (2 if is_v7 else 1)
    target_rows = max(pack, (target_elems // lanes) // pack * pack)
    tile_rows = min(_round_up(rows, pack), target_rows)
    n_row_tiles = -(-rows // tile_rows)

    # Only split across the leading axis on v7x (2 TCs); on v5e/v6e it is a
    # serial loop that may re-DMA a duplicated clamped tile for nothing.
    outer = 2 if (is_v7 and n_row_tiles >= 2) else 1
    inner = -(-n_row_tiles // outer)
    n_full_tiles = rows // tile_rows
    needs_mask = (rows % tile_rows != 0) or (outer * inner != n_row_tiles)

    def in_index_map(c, i):
        # Clamp so every DMA stays in bounds; the in-kernel mask zeroes
        # logically out-of-range rows (incl. fully duplicated clamped tiles).
        return (jnp.minimum(c * inner + i, n_row_tiles - 1), 0)

    kernel = functools.partial(
        _l2_stream_kernel, rows=rows, tile_rows=tile_rows, lanes=lanes,
        inner_tiles=inner, n_full_tiles=n_full_tiles, needs_mask=needs_mask)

    partials = pl.pallas_call(
        kernel,
        out_shape=jax.ShapeDtypeStruct((outer, 1), jnp.float32),
        grid_spec=pltpu.PrefetchScalarGridSpec(
            num_scalar_prefetch=0,
            grid=(outer, inner),
            in_specs=[pl.BlockSpec((tile_rows, lanes), in_index_map)],
            out_specs=pl.BlockSpec(
                (1, 1), lambda c, i: (c, 0), memory_space=pltpu.SMEM),
            scratch_shapes=[pltpu.VMEM((8, lanes), jnp.float32)],
        ),
        # TODO(synk): switch the leading axis to pltpu.CORE_PARALLEL on v7x
        # once validated on hardware; "parallel" is the safe cross-gen choice.
        compiler_params=pltpu.CompilerParams(
            dimension_semantics=("parallel", "arbitrary")),
    )(x2d)

    return jnp.sum(partials)


# --------------------------------- wrapper -----------------------------------

def l2_reg_loss(x):
    """sum(x ** 2) over all elements of x (any shape), computed in Pallas."""
    flat = x.reshape(-1)
    n = flat.shape[0]
    if n == 0:
        return jnp.zeros((), jnp.float32)

    # 128-aligned prefix goes through the Pallas kernel; the <128-element
    # ragged remainder is summed in the wrapper (no zero-padded HBM copy).
    n_main = (n // _MIN_LANES) * _MIN_LANES
    tail_sum = None
    if n_main < n:
        tail_sum = jnp.sum(flat[n_main:].astype(jnp.float32) ** 2)
    if n_main == 0:
        return tail_sum

    main = flat[:n_main] if n_main < n else flat
    lanes = next(c for c in _LANE_CANDIDATES if n_main % c == 0)
    rows = n_main // lanes
    x2d = main.reshape(rows, lanes)        # contiguous -> free bitcast

    if n_main <= _SMALL_MAX_ELEMS:
        total = _l2_sum_small(x2d)
    else:
        total = _l2_sum_stream(x2d)

    if tail_sum is not None:
        total = total + tail_sum
    return total


if __name__ == "__main__":
    key = jax.random.PRNGKey(0)

    # Primary example: NCHW-style conv feature map, small shape.
    x = jax.random.normal(key, (2, 4, 16, 16), dtype=jnp.float32)
    loss = jax.block_until_ready(l2_reg_loss(x))
    ref = jnp.sum(x.astype(jnp.float32) ** 2)
    assert jnp.allclose(loss, ref, rtol=1e-5, atol=1e-5), (loss, ref)

    # Extra coverage: streaming path with a masked edge tile, ragged <128 tail,
    # and bf16 sublane packing.
    extra = [
        jax.random.normal(jax.random.PRNGKey(1), (2, 8, 128, 257), jnp.float32),
        jax.random.normal(jax.random.PRNGKey(2), (3, 5, 7, 11), jnp.float32),
        jax.random.normal(jax.random.PRNGKey(3), (1024, 1024),
                          jnp.float32).astype(jnp.bfloat16),
    ]
    for xc in extra:
        got = jax.block_until_ready(l2_reg_loss(xc))
        want = jnp.sum(xc.astype(jnp.float32) ** 2)
        assert jnp.allclose(got, want, rtol=1e-4, atol=1e-3), (xc.shape, got, want)

    print("KERNEL_OK")
</pallas_src>

<mosaic_0001>
module attributes {stable_mosaic.version = 11 : i64} {
  func.func @_l2_small_kernel(%arg0: i32, %arg1: memref<2x1024xf32, #tpu.memory_space<vmem>>, %arg2: memref<1x1xf32, #tpu.memory_space<smem>>) attributes {dimension_semantics = [#tpu.dimension_semantics<arbitrary>], iteration_bounds = array<i64: 1>, scalar_prefetch = 0 : i64, scratch_operands = 0 : i64, tpu.core_type = #tpu.core_type<tc>, window_params = [{pipeline_mode = #tpu.pipeline_mode<synchronous>, transform_indices = @transform_0, window_bounds = array<i64: 2, 1024>}, {transform_indices = @transform_1, window_bounds = array<i64: 1, 1>}]} {
    %c0 = arith.constant 0 : index
    %c0_0 = arith.constant 0 : index
    %0 = vector.load %arg1[%c0, %c0_0] : memref<2x1024xf32, #tpu.memory_space<vmem>>, vector<2x1024xf32>
    %1 = arith.mulf %0, %0 : vector<2x1024xf32>
    %2 = vector.shape_cast %1 : vector<2x1024xf32> to vector<1x2x1024xf32>
    %cst = arith.constant dense<0.000000e+00> : vector<1xf32>
    %3 = vector.multi_reduction <add>, %2, %cst [1, 2] : vector<1x2x1024xf32> to vector<1xf32>
    %4 = vector.shape_cast %3 : vector<1xf32> to vector<1x1x1xf32>
    %5 = vector.extract %4[0, 0, 0] : f32 from vector<1x1x1xf32>
    %c0_1 = arith.constant 0 : index
    %c0_2 = arith.constant 0 : index
    %6 = memref.load %arg2[%c0_1, %c0_2] : memref<1x1xf32, #tpu.memory_space<smem>>
    memref.store %5, %arg2[%c0_1, %c0_2] : memref<1x1xf32, #tpu.memory_space<smem>>
    return
  }
  func.func @transform_0(%arg0: i32) -> (i32, i32) {
    %c0_i32 = arith.constant 0 : i32
    %c0_i32_0 = arith.constant 0 : i32
    %c0_i32_1 = arith.constant 0 : i32
    return %c0_i32, %c0_i32_0 : i32, i32
  }
  func.func @transform_1(%arg0: i32) -> (i32, i32) {
    %c0_i32 = arith.constant 0 : i32
    %c0_i32_0 = arith.constant 0 : i32
    %c0_i32_1 = arith.constant 0 : i32
    return %c0_i32, %c0_i32_0 : i32, i32
  }
}

</mosaic_0001>

<llo_original>
// kernel: tpu_custom_call.1
$region0: #{tpu_custom_call.1}
  #allocation0 [shape = 'u32[]', space=smem, size = 0x4, offset = 0x4, fixed_abs, tag = 'smem constant byte address 0x4 - core index']
  #allocation1 [shape = 'u32[144,128]{1,0:T(1,128)}', space=vmem, size = 0x12000, scoped, tag = 'internal scratch']
  %s0 = inlined_call_operand.hbm [shape: f32[2,1024], index: 0, kind: input, shape index: {}]
  %s1 = inlined_call_operand.hbm [shape: f32[1,1], index: 1, kind: output, shape index: {}]
  %s2 = sld [smem:[#allocation0]]
  $region18: #{tpu_custom_call.1} parent=0
    _
  %s4 = ssub.s32 1, %s2
  %s5 = scalar_select 0, %s4, %s2
  $region1: #{tpu_custom_call.1} parent=0
    #allocation2 [shape = 'u8[8192]{0}', space=vmem, size = 0x2000, scoped, tag = 'input window, operand 0, single buffered']
    #allocation3 [shape = 's32[1]{0}', space=sflag, size = 0x4, scoped, tag = 'scoped memory for tpu_custom_call.1']
    #allocation4 [shape = 's32[1]{0}', space=sflag, size = 0x4, scoped, tag = 'scoped memory for tpu_custom_call.1']
    #allocation5 [shape = 'u8[512]{0}', space=smem, size = 0x200, scoped, tag = 'output window, operand 0, single buffered']
    %6 = vsyncpa [#allocation3], 0
    %7 = vsyncpa [#allocation4], 0
    // Predicated region
    $region2: #{tpu_custom_call.1} parent=1 // pred_check
      _
    $region3: #{tpu_custom_call.1} parent=1 // pred_check_branch
      %9 = sbr.rel (0) target = $region5
    $region4: #{tpu_custom_call.1} parent=1 // pred_region
      %s11 = ssub.s32 256, 256
      %12 = vsyncadd [#allocation3], %s11
      %s14 = sshll.u32 [#allocation2], 4
      %s15 = int_to_ptr.vmem [resolvable:$true] %s14
      %17 = dma.hbm_to_vmem [thread:$0]  %s0, 256, %s15, [#allocation3]
    $region5: #{tpu_custom_call.1} parent=1 // pred_fallthru
      _
    // Predicated region
    $region6: #{tpu_custom_call.1} parent=1 // pred_check
      _
    $region7: #{tpu_custom_call.1} parent=1 // pred_check_branch
      %19 = sbr.rel (0) target = $region9
    $region8: #{tpu_custom_call.1} parent=1 // pred_region
      %20 = dma.done [#allocation3], 256
    $region9: #{tpu_custom_call.1} parent=1 // pred_fallthru
      _
    %v21 = vld [vmem:[#allocation2] sm:$0xff]
    %v22 = vld [vmem:[#allocation2 + $0x8] sm:$0xff]
    %v23 = vmul.f32 %v21, %v21
    %v24 = vmul.f32 %v22, %v22
    %v27 = vcombine.high %v23, %v23
    %v29 = vunpack.c.l.s4 1983009808
    %v30 = vunpack.c.0.s8 %v29
    %v31 = vlaneseq
    %v32 = vshrl.u32 %v31, 7
    %v33 = vsub.s32 %v30, %v32
    %v34 = vrot.slane %v23, %v33
    %v36 = vunpack.c.l.s4 1983009808
    %v37 = vunpack.c.0.s8 %v36
    %v38 = vlaneseq
    %v39 = vshrl.u32 %v38, 7
    %v40 = vsub.s32 %v37, %v39
    %v41 = vrot.slane %v27, %v40
    %v42 = vcombine.high %v34, %v34
    %v43 = vcombine.high %v41, %v41
    %v44 = vcombine.high %v24, %v24
    %v46 = vunpack.c.l.s4 1983009808
    %v47 = vunpack.c.0.s8 %v46
    %v48 = vlaneseq
    %v49 = vshrl.u32 %v48, 7
    %v50 = vsub.s32 %v47, %v49
    %v51 = vrot.slane %v24, %v50
    %v53 = vunpack.c.l.s4 1983009808
    %v54 = vunpack.c.0.s8 %v53
    %v55 = vlaneseq
    %v56 = vshrl.u32 %v55, 7
    %v57 = vsub.s32 %v54, %v56
    %v58 = vrot.slane %v44, %v57
    %v59 = vcombine.high %v51, %v51
    %v60 = vcombine.high %v58, %v58
    %vm69 = vcmask 1041408
    %v70 = vsel %vm69, %v34, 0.0
    %v71 = vsel %vm69, %v42, 0.0
    %v72 = vadd.f32 %v70, %v71
    %v73 = vsel %vm69, %v41, 0.0
    %v74 = vadd.f32 %v72, %v73
    %v75 = vsel %vm69, %v43, 0.0
    %v76 = vadd.f32 %v74, %v75
    %v77 = vsel %vm69, %v51, 0.0
    %v78 = vadd.f32 %v76, %v77
    %v79 = vsel %vm69, %v59, 0.0
    %v80 = vadd.f32 %v78, %v79
    %v81 = vsel %vm69, %v58, 0.0
    %v82 = vadd.f32 %v80, %v81
    %v83 = vsel %vm69, %v60, 0.0
    %v84 = vadd.f32 %v82, %v83
    %85 = vadd.xlane.f32.xlu0 %v84
    %v86 = vpop.xlane.xlu0 %85
    %v87 = vrot.slane %v86, 4
    %v88 = vadd.f32 %v86, %v87
    %v89 = vrot.slane %v88, 2
    %v90 = vadd.f32 %v88, %v89
    %v91 = vrot.slane %v90, 1
    %v92 = vadd.f32 %v90, %v91
    %s93 = vtos %v92
    %s94 = scalar_lea.smem [#allocation5], 0
    %95 = sst [smem:[%s94]] %s93
    // Predicated region
    $region10: #{tpu_custom_call.1} parent=1 // pred_check
      _
    $region11: #{tpu_custom_call.1} parent=1 // pred_check_branch
      %97 = sbr.rel (0) target = $region13
    $region12: #{tpu_custom_call.1} parent=1 // pred_region
      %s99 = ssub.s32 16, 16
      %100 = vsyncadd [#allocation4], %s99
      %103 = dma.smem_to_hbm [#allocation5], 16, %s1, [#allocation4]
    $region13: #{tpu_custom_call.1} parent=1 // pred_fallthru
      _
    // Predicated region
    $region14: #{tpu_custom_call.1} parent=1 // pred_check
      _
    $region15: #{tpu_custom_call.1} parent=1 // pred_check_branch
      %105 = sbr.rel (0) target = $region17
    $region16: #{tpu_custom_call.1} parent=1 // pred_region
      %106 = dma.done [#allocation4], 16
    $region17: #{tpu_custom_call.1} parent=1 // pred_fallthru
      _
    %107 = sfence
    %108 = vsyncpa [#allocation3], 1
    %109 = vsyncpa [#allocation4], 1

</llo_original>
